<compile_context>
chip_gen: v6e
topology: v6e:2x2x1
jax: 0.10.0
libtpu: 0.0.40
codegen_flags: <defaults>
</compile_context>

<pallas_src>
import math
import functools

import jax
import jax.numpy as jnp
from jax.experimental import pallas as pl
from jax.experimental.pallas import tpu as pltpu


def _fusion_kernel(*refs, num_pos):
    """out = relu(sum_i pos_i @ W_i + b) for one row tile (concat folded in).

    refs layout: pos_0..pos_{n-1}, w_0..w_{n-1}, bias, out.
    With G-packing, pos_i is (tr, G*dim_pos), W_i = kron(I_G, W_slice_i) is
    (G*dim_pos, G*hidden) and the output block is lane-dense (tr, G*hidden).
    """
    pos_refs = refs[:num_pos]
    w_refs = refs[num_pos:2 * num_pos]
    b_ref = refs[2 * num_pos]
    out_ref = refs[2 * num_pos + 1]

    acc = jnp.dot(pos_refs[0][...], w_refs[0][...],
                  preferred_element_type=jnp.float32)
    for i in range(1, num_pos):
        acc = acc + jnp.dot(pos_refs[i][...], w_refs[i][...],
                            preferred_element_type=jnp.float32)
    acc = acc + b_ref[...]
    out_ref[...] = jnp.maximum(acc, 0.0).astype(out_ref.dtype)


def rel_position_fusion(pos, weight, bias, *, row_tile=4096, out_dtype=None):
    """Pallas implementation of RelPositionFusion.forward.

    pos      : sequence of num_pos arrays, each [..., dim_pos] with identical
               leading dims (e.g. [B, S, S, dim_pos]), identical dtypes.
    weight   : [num_pos * dim_pos, hidden]   (in_features x out_features)
    bias     : [hidden] (or [1, hidden])
    row_tile : max packed-row tile per grid step (kept moderate so the
               double-buffered VMEM footprint also fits v7x's 64 MiB).
    returns  : [..., hidden] in out_dtype (defaults to pos dtype).
    """
    pos = list(pos)
    num_pos = len(pos)
    dim_pos = pos[0].shape[-1]
    lead = pos[0].shape[:-1]
    hidden = weight.shape[1]
    n_rows = math.prod(lead)

    x_dtype = pos[0].dtype
    if out_dtype is None:
        out_dtype = x_dtype

    # Lane-dense packing factor: fold G consecutive rows into the lane axis so
    # the output block's last dim is G*hidden (>=128 -> unmasked stores) and
    # the pos blocks' last dim is G*dim_pos (less lane padding in VMEM).
    if hidden < 128 and 128 % hidden == 0 and n_rows % (128 // hidden) == 0:
        G = 128 // hidden
    else:
        G = 1
    n_packed = n_rows // G

    # Free (contiguity-preserving) reshapes only -- no casts, no pads.
    flat = [p.reshape(n_packed, G * dim_pos) for p in pos]

    # Fold the concat into the matmul: split W along its input dim; expand each
    # slice to a block-diagonal kron(I_G, W_i) for the packed layout (tiny).
    eye_g = jnp.eye(G, dtype=weight.dtype)
    w_slices = []
    for i in range(num_pos):
        w_i = weight[i * dim_pos:(i + 1) * dim_pos, :]
        if G > 1:
            w_i = jnp.kron(eye_g, w_i)           # (G*dim_pos, G*hidden)
        w_slices.append(w_i.astype(x_dtype))

    bias_packed = jnp.tile(bias.reshape(-1), G).reshape(1, G * hidden)
    bias_packed = bias_packed.astype(jnp.float32)

    # Row tile: multiple of the sublane quantum for the input dtype
    # (8 for f32, 16 for bf16, 32 for 8-bit), or the full (possibly ragged)
    # row extent when a single block suffices.  Partial last block is fine --
    # rows are independent and Pallas masks the out-of-bounds writeback.
    sub = max(8, 32 // jnp.dtype(x_dtype).itemsize)
    if n_packed <= row_tile:
        tr = n_packed
    else:
        tr = max(sub, (min(row_tile, n_packed) // sub) * sub)
    grid = pl.cdiv(n_packed, tr)

    in_specs = (
        [pl.BlockSpec((tr, G * dim_pos), lambda r: (r, 0))
         for _ in range(num_pos)]
        + [pl.BlockSpec((G * dim_pos, G * hidden), lambda r: (0, 0))
           for _ in range(num_pos)]
        + [pl.BlockSpec((1, G * hidden), lambda r: (0, 0))]
    )

    out = pl.pallas_call(
        functools.partial(_fusion_kernel, num_pos=num_pos),
        out_shape=jax.ShapeDtypeStruct((n_packed, G * hidden), out_dtype),
        grid=(grid,),
        in_specs=in_specs,
        out_specs=pl.BlockSpec((tr, G * hidden), lambda r: (r, 0)),
        compiler_params=pltpu.CompilerParams(
            dimension_semantics=("parallel",),
            # 48 MiB: covers tr=4096 packed rows double-buffered with headroom;
            # within v7x's 64 MiB physical and well under v5e/v6e's 128 MiB.
            vmem_limit_bytes=48 * 1024 * 1024),
    )(*flat, *w_slices, bias_packed)

    # Contiguous reshape back to the logical layout (free).
    return out.reshape(*lead, hidden)


def reference(pos, weight, bias):
    """Pure-JAX mirror of the PyTorch forward."""
    x = jnp.concatenate(list(pos), axis=-1)
    return jax.nn.relu(x @ weight + bias.reshape(1, -1))


if __name__ == "__main__":
    # Small shapes consistent with the module: pos is a list of num_pos
    # relative-position tensors [B, S, S, dim_pos].
    B, S, dim_pos, num_pos, hidden = 2, 8, 8, 4, 32

    rng = jax.random.PRNGKey(0)
    k_pos, k_w, k_b = jax.random.split(rng, 3)
    pos_keys = jax.random.split(k_pos, num_pos)
    pos = [jax.random.normal(k, (B, S, S, dim_pos), jnp.float32)
           for k in pos_keys]
    weight = jax.random.normal(k_w, (num_pos * dim_pos, hidden),
                               jnp.float32) * 0.1
    bias = jax.random.normal(k_b, (hidden,), jnp.float32) * 0.05

    out = rel_position_fusion(pos, weight, bias)
    out = jax.block_until_ready(out)

    ref = reference(pos, weight, bias)
    assert out.shape == (B, S, S, hidden)
    assert jnp.allclose(out, ref, rtol=1e-5, atol=1e-5), \
        float(jnp.max(jnp.abs(out - ref)))
    print("KERNEL_OK")
</pallas_src>

<mosaic_0001>
module attributes {stable_mosaic.version = 11 : i64} {
  func.func @_fusion_kernel(%arg0: i32, %arg1: memref<32x32xf32, #tpu.memory_space<vmem>>, %arg2: memref<32x32xf32, #tpu.memory_space<vmem>>, %arg3: memref<32x32xf32, #tpu.memory_space<vmem>>, %arg4: memref<32x32xf32, #tpu.memory_space<vmem>>, %arg5: memref<32x128xf32, #tpu.memory_space<vmem>>, %arg6: memref<32x128xf32, #tpu.memory_space<vmem>>, %arg7: memref<32x128xf32, #tpu.memory_space<vmem>>, %arg8: memref<32x128xf32, #tpu.memory_space<vmem>>, %arg9: memref<1x128xf32, #tpu.memory_space<vmem>>, %arg10: memref<32x128xf32, #tpu.memory_space<vmem>>) attributes {dimension_semantics = [#tpu.dimension_semantics<parallel>], iteration_bounds = array<i64: 1>, scalar_prefetch = 0 : i64, scratch_operands = 0 : i64, tpu.core_type = #tpu.core_type<tc>, window_params = [{transform_indices = @transform_0, window_bounds = array<i64: 32, 32>}, {transform_indices = @transform_1, window_bounds = array<i64: 32, 32>}, {transform_indices = @transform_2, window_bounds = array<i64: 32, 32>}, {transform_indices = @transform_3, window_bounds = array<i64: 32, 32>}, {pipeline_mode = #tpu.pipeline_mode<synchronous>, transform_indices = @transform_4, window_bounds = array<i64: 32, 128>}, {pipeline_mode = #tpu.pipeline_mode<synchronous>, transform_indices = @transform_5, window_bounds = array<i64: 32, 128>}, {pipeline_mode = #tpu.pipeline_mode<synchronous>, transform_indices = @transform_6, window_bounds = array<i64: 32, 128>}, {pipeline_mode = #tpu.pipeline_mode<synchronous>, transform_indices = @transform_7, window_bounds = array<i64: 32, 128>}, {pipeline_mode = #tpu.pipeline_mode<synchronous>, transform_indices = @transform_8, window_bounds = array<i64: 1, 128>}, {transform_indices = @transform_9, window_bounds = array<i64: 32, 128>}]} {
    %c0 = arith.constant 0 : index
    %c0_0 = arith.constant 0 : index
    %0 = vector.load %arg1[%c0, %c0_0] : memref<32x32xf32, #tpu.memory_space<vmem>>, vector<32x32xf32>
    %c0_1 = arith.constant 0 : index
    %c0_2 = arith.constant 0 : index
    %1 = vector.load %arg5[%c0_1, %c0_2] : memref<32x128xf32, #tpu.memory_space<vmem>>, vector<32x128xf32>
    %cst = arith.constant dense<0.000000e+00> : vector<32x128xf32>
    %2 = tpu.matmul %0, %1, %cst {dimension_numbers = #tpu.dot_dimension_numbers<[1], [0], [0], [1], [0, 0, 1, 1], [], []>} : vector<32x32xf32>, vector<32x128xf32>, vector<32x128xf32> -> vector<32x128xf32>
    %c0_3 = arith.constant 0 : index
    %c0_4 = arith.constant 0 : index
    %3 = vector.load %arg2[%c0_3, %c0_4] : memref<32x32xf32, #tpu.memory_space<vmem>>, vector<32x32xf32>
    %c0_5 = arith.constant 0 : index
    %c0_6 = arith.constant 0 : index
    %4 = vector.load %arg6[%c0_5, %c0_6] : memref<32x128xf32, #tpu.memory_space<vmem>>, vector<32x128xf32>
    %cst_7 = arith.constant dense<0.000000e+00> : vector<32x128xf32>
    %5 = tpu.matmul %3, %4, %cst_7 {dimension_numbers = #tpu.dot_dimension_numbers<[1], [0], [0], [1], [0, 0, 1, 1], [], []>} : vector<32x32xf32>, vector<32x128xf32>, vector<32x128xf32> -> vector<32x128xf32>
    %6 = arith.addf %2, %5 : vector<32x128xf32>
    %c0_8 = arith.constant 0 : index
    %c0_9 = arith.constant 0 : index
    %7 = vector.load %arg3[%c0_8, %c0_9] : memref<32x32xf32, #tpu.memory_space<vmem>>, vector<32x32xf32>
    %c0_10 = arith.constant 0 : index
    %c0_11 = arith.constant 0 : index
    %8 = vector.load %arg7[%c0_10, %c0_11] : memref<32x128xf32, #tpu.memory_space<vmem>>, vector<32x128xf32>
    %cst_12 = arith.constant dense<0.000000e+00> : vector<32x128xf32>
    %9 = tpu.matmul %7, %8, %cst_12 {dimension_numbers = #tpu.dot_dimension_numbers<[1], [0], [0], [1], [0, 0, 1, 1], [], []>} : vector<32x32xf32>, vector<32x128xf32>, vector<32x128xf32> -> vector<32x128xf32>
    %10 = arith.addf %6, %9 : vector<32x128xf32>
    %c0_13 = arith.constant 0 : index
    %c0_14 = arith.constant 0 : index
    %11 = vector.load %arg4[%c0_13, %c0_14] : memref<32x32xf32, #tpu.memory_space<vmem>>, vector<32x32xf32>
    %c0_15 = arith.constant 0 : index
    %c0_16 = arith.constant 0 : index
    %12 = vector.load %arg8[%c0_15, %c0_16] : memref<32x128xf32, #tpu.memory_space<vmem>>, vector<32x128xf32>
    %cst_17 = arith.constant dense<0.000000e+00> : vector<32x128xf32>
    %13 = tpu.matmul %11, %12, %cst_17 {dimension_numbers = #tpu.dot_dimension_numbers<[1], [0], [0], [1], [0, 0, 1, 1], [], []>} : vector<32x32xf32>, vector<32x128xf32>, vector<32x128xf32> -> vector<32x128xf32>
    %14 = arith.addf %10, %13 : vector<32x128xf32>
    %c0_18 = arith.constant 0 : index
    %c0_19 = arith.constant 0 : index
    %15 = vector.load %arg9[%c0_18, %c0_19] : memref<1x128xf32, #tpu.memory_space<vmem>>, vector<1x128xf32>
    %16 = vector.broadcast %15 : vector<1x128xf32> to vector<32x128xf32>
    %17 = arith.addf %14, %16 : vector<32x128xf32>
    %cst_20 = arith.constant 0.000000e+00 : f32
    %18 = vector.broadcast %cst_20 : f32 to vector<32x128xf32>
    %19 = arith.maximumf %17, %18 : vector<32x128xf32>
    %c0_21 = arith.constant 0 : index
    %c0_22 = arith.constant 0 : index
    %20 = vector.load %arg10[%c0_21, %c0_22] : memref<32x128xf32, #tpu.memory_space<vmem>>, vector<32x128xf32>
    tpu.vector_store %arg10[%c0_21, %c0_22], %19 {strides = array<i32>} : memref<32x128xf32, #tpu.memory_space<vmem>>, vector<32x128xf32>,
    return
  }
  func.func @transform_0(%arg0: i32) -> (i32, i32) {
    %c0_i32 = arith.constant 0 : i32
    %c0_i32_0 = arith.constant 0 : i32
    return %arg0, %c0_i32 : i32, i32
  }
  func.func @transform_1(%arg0: i32) -> (i32, i32) {
    %c0_i32 = arith.constant 0 : i32
    %c0_i32_0 = arith.constant 0 : i32
    return %arg0, %c0_i32 : i32, i32
  }
  func.func @transform_2(%arg0: i32) -> (i32, i32) {
    %c0_i32 = arith.constant 0 : i32
    %c0_i32_0 = arith.constant 0 : i32
    return %arg0, %c0_i32 : i32, i32
  }
  func.func @transform_3(%arg0: i32) -> (i32, i32) {
    %c0_i32 = arith.constant 0 : i32
    %c0_i32_0 = arith.constant 0 : i32
    return %arg0, %c0_i32 : i32, i32
  }
  func.func @transform_4(%arg0: i32) -> (i32, i32) {
    %c0_i32 = arith.constant 0 : i32
    %c0_i32_0 = arith.constant 0 : i32
    %c0_i32_1 = arith.constant 0 : i32
    return %c0_i32, %c0_i32_0 : i32, i32
  }
  func.func @transform_5(%arg0: i32) -> (i32, i32) {
    %c0_i32 = arith.constant 0 : i32
    %c0_i32_0 = arith.constant 0 : i32
    %c0_i32_1 = arith.constant 0 : i32
    return %c0_i32, %c0_i32_0 : i32, i32
  }
  func.func @transform_6(%arg0: i32) -> (i32, i32) {
    %c0_i32 = arith.constant 0 : i32
    %c0_i32_0 = arith.constant 0 : i32
    %c0_i32_1 = arith.constant 0 : i32
    return %c0_i32, %c0_i32_0 : i32, i32
  }
  func.func @transform_7(%arg0: i32) -> (i32, i32) {
    %c0_i32 = arith.constant 0 : i32
    %c0_i32_0 = arith.constant 0 : i32
    %c0_i32_1 = arith.constant 0 : i32
    return %c0_i32, %c0_i32_0 : i32, i32
  }
  func.func @transform_8(%arg0: i32) -> (i32, i32) {
    %c0_i32 = arith.constant 0 : i32
    %c0_i32_0 = arith.constant 0 : i32
    %c0_i32_1 = arith.constant 0 : i32
    return %c0_i32, %c0_i32_0 : i32, i32
  }
  func.func @transform_9(%arg0: i32) -> (i32, i32) {
    %c0_i32 = arith.constant 0 : i32
    %c0_i32_0 = arith.constant 0 : i32
    return %arg0, %c0_i32 : i32, i32
  }
}

</mosaic_0001>

<llo_original>
// kernel: tpu_custom_call.1
$region0: #{tpu_custom_call.1}
  #allocation0 [shape = 'u32[]', space=smem, size = 0x4, offset = 0x4, fixed_abs, tag = 'smem constant byte address 0x4 - core index']
  #allocation1 [shape = 'u32[144,128]{1,0:T(1,128)}', space=vmem, size = 0x12000, scoped, tag = 'internal scratch']
  %s0 = inlined_call_operand.hbm [shape: f32[32,32], index: 0, kind: input, shape index: {}]
  %s1 = inlined_call_operand.hbm [shape: f32[32,32], index: 1, kind: input, shape index: {}]
  %s2 = inlined_call_operand.hbm [shape: f32[32,32], index: 2, kind: input, shape index: {}]
  %s3 = inlined_call_operand.hbm [shape: f32[32,32], index: 3, kind: input, shape index: {}]
  %s4 = inlined_call_operand.hbm [shape: f32[32,128], index: 4, kind: input, shape index: {}]
  %s5 = inlined_call_operand.hbm [shape: f32[32,128], index: 5, kind: input, shape index: {}]
  %s6 = inlined_call_operand.hbm [shape: f32[32,128], index: 6, kind: input, shape index: {}]
  %s7 = inlined_call_operand.hbm [shape: f32[32,128], index: 7, kind: input, shape index: {}]
  %s8 = inlined_call_operand.vmem [shape: f32[1,128], index: 8, kind: input, shape index: {}]
  %s9 = inlined_call_operand.hbm [shape: f32[32,128], index: 9, kind: output, shape index: {}]
  %s10 = sld [smem:[#allocation0]]
  $region78: #{tpu_custom_call.1} parent=0
    _
  %s12 = ssub.s32 1, %s10
  %s13 = scalar_select 0, %s12, %s10
  $region1: #{tpu_custom_call.1} parent=0
    #allocation2 [shape = 'u8[16384]{0}', space=vmem, size = 0x4000, scoped, tag = 'input window, operand 0, single buffered']
    #allocation3 [shape = 's32[1]{0}', space=sflag, size = 0x4, scoped, tag = 'scoped memory for tpu_custom_call.1']
    #allocation4 [shape = 's32[1]{0}', space=sflag, size = 0x4, scoped, tag = 'scoped memory for tpu_custom_call.1']
    #allocation5 [shape = 'u8[16384]{0}', space=vmem, size = 0x4000, scoped, tag = 'input window, operand 1, single buffered']
    #allocation6 [shape = 's32[1]{0}', space=sflag, size = 0x4, scoped, tag = 'scoped memory for tpu_custom_call.1']
    #allocation7 [shape = 'u8[16384]{0}', space=vmem, size = 0x4000, scoped, tag = 'input window, operand 2, single buffered']
    #allocation8 [shape = 'u8[16384]{0}', space=vmem, size = 0x4000, scoped, tag = 'input window, operand 3, single buffered']
    #allocation9 [shape = 's32[1]{0}', space=sflag, size = 0x4, scoped, tag = 'scoped memory for tpu_custom_call.1']
    #allocation10 [shape = 'u8[16384]{0}', space=vmem, size = 0x4000, scoped, tag = 'input window, operand 4, single buffered']
    #allocation11 [shape = 'u8[16384]{0}', space=vmem, size = 0x4000, scoped, tag = 'input window, operand 5, single buffered']
    #allocation12 [shape = 's32[1]{0}', space=sflag, size = 0x4, scoped, tag = 'scoped memory for tpu_custom_call.1']
    #allocation13 [shape = 'u8[16384]{0}', space=vmem, size = 0x4000, scoped, tag = 'input window, operand 6, single buffered']
    #allocation14 [shape = 'u8[16384]{0}', space=vmem, size = 0x4000, scoped, tag = 'input window, operand 7, single buffered']
    #allocation15 [shape = 's32[1]{0}', space=sflag, size = 0x4, scoped, tag = 'scoped memory for tpu_custom_call.1']
    #allocation16 [shape = 'u8[16384]{0}', space=vmem, size = 0x4000, scoped, tag = 'output window, operand 0, single buffered']
    %14 = vsyncpa [#allocation3], 0
    %15 = vsyncpa [#allocation6], 0
    %16 = vsyncpa [#allocation9], 0
    %17 = vsyncpa [#allocation12], 0
    %18 = vsyncpa [#allocation15], 0
    %19 = vsyncpa [#allocation4], 0
    // Predicated region
    $region2: #{tpu_custom_call.1} parent=1 // pred_check
      _
    $region3: #{tpu_custom_call.1} parent=1 // pred_check_branch
      %21 = sbr.rel (0) target = $region5
    $region4: #{tpu_custom_call.1} parent=1 // pred_region
      %s23 = ssub.s32 512, 512
      %24 = vsyncadd [#allocation3], %s23
      %s25 = sshll.u32 [#allocation2], 4
      %s26 = int_to_ptr.vmem [resolvable:$true] %s25
      %31 = dma.hbm_to_vmem [thread:$0]  %s0, 512, %s26, [#allocation3], 128, 128, 8
    $region5: #{tpu_custom_call.1} parent=1 // pred_fallthru
      _
    // Predicated region
    $region6: #{tpu_custom_call.1} parent=1 // pred_check
      _
    $region7: #{tpu_custom_call.1} parent=1 // pred_check_branch
      %33 = sbr.rel (0) target = $region9
    $region8: #{tpu_custom_call.1} parent=1 // pred_region
      %s35 = ssub.s32 512, 512
      %36 = vsyncadd [#allocation6], %s35
      %s37 = sshll.u32 [#allocation5], 4
      %s38 = int_to_ptr.vmem [resolvable:$true] %s37
      %43 = dma.hbm_to_vmem [thread:$0]  %s1, 512, %s38, [#allocation6], 128, 128, 8
    $region9: #{tpu_custom_call.1} parent=1 // pred_fallthru
      _
    // Predicated region
    $region10: #{tpu_custom_call.1} parent=1 // pred_check
      _
    $region11: #{tpu_custom_call.1} parent=1 // pred_check_branch
      %45 = sbr.rel (0) target = $region13
    $region12: #{tpu_custom_call.1} parent=1 // pred_region
      %s47 = ssub.s32 512, 512
      %48 = vsyncadd [#allocation6], %s47
      %s49 = sshll.u32 [#allocation7], 4
      %s50 = int_to_ptr.vmem [resolvable:$true] %s49
      %55 = dma.hbm_to_vmem [thread:$0]  %s2, 512, %s50, [#allocation6], 128, 128, 8
    $region13: #{tpu_custom_call.1} parent=1 // pred_fallthru
      _
    // Predicated region
    $region14: #{tpu_custom_call.1} parent=1 // pred_check
      _
    $region15: #{tpu_custom_call.1} parent=1 // pred_check_branch
      %57 = sbr.rel (0) target = $region17
    $region16: #{tpu_custom_call.1} parent=1 // pred_region
      %s59 = ssub.s32 512, 512
      %60 = vsyncadd [#allocation9], %s59
      %s61 = sshll.u32 [#allocation8], 4
      %s62 = int_to_ptr.vmem [resolvable:$true] %s61
      %67 = dma.hbm_to_vmem [thread:$0]  %s3, 512, %s62, [#allocation9], 128, 128, 8
    $region17: #{tpu_custom_call.1} parent=1 // pred_fallthru
      _
    // Predicated region
    $region18: #{tpu_custom_call.1} parent=1 // pred_check
      _
    $region19: #{tpu_custom_call.1} parent=1 // pred_check_branch
      %69 = sbr.rel (0) target = $region21
    $region20: #{tpu_custom_call.1} parent=1 // pred_region
      %s71 = ssub.s32 512, 512
      %72 = vsyncadd [#allocation9], %s71
      %s73 = sshll.u32 [#allocation10], 4
      %s74 = int_to_ptr.vmem [resolvable:$true] %s73
      %79 = dma.hbm_to_vmem [thread:$0]  %s4, 512, %s74, [#allocation9], 128, 128, 8
    $region21: #{tpu_custom_call.1} parent=1 // pred_fallthru
      _
    // Predicated region
    $region22: #{tpu_custom_call.1} parent=1 // pred_check
      _
    $region23: #{tpu_custom_call.1} parent=1 // pred_check_branch
      %81 = sbr.rel (0) target = $region25
    $region24: #{tpu_custom_call.1} parent=1 // pred_region
      %s83 = ssub.s32 512, 512
      %84 = vsyncadd [#allocation12], %s83
      %s85 = sshll.u32 [#allocation11], 4
      %s86 = int_to_ptr.vmem [resolvable:$true] %s85
      %91 = dma.hbm_to_vmem [thread:$0]  %s5, 512, %s86, [#allocation12], 128, 128, 8
    $region25: #{tpu_custom_call.1} parent=1 // pred_fallthru
      _
    // Predicated region
    $region26: #{tpu_custom_call.1} parent=1 // pred_check
      _
    $region27: #{tpu_custom_call.1} parent=1 // pred_check_branch
      %93 = sbr.rel (0) target = $region29
    $region28: #{tpu_custom_call.1} parent=1 // pred_region
      %s95 = ssub.s32 512, 512
      %96 = vsyncadd [#allocation12], %s95
      %s97 = sshll.u32 [#allocation13], 4
      %s98 = int_to_ptr.vmem [resolvable:$true] %s97
      %103 = dma.hbm_to_vmem [thread:$0]  %s6, 512, %s98, [#allocation12], 128, 128, 8
    $region29: #{tpu_custom_call.1} parent=1 // pred_fallthru
      _
    // Predicated region
    $region30: #{tpu_custom_call.1} parent=1 // pred_check
      _
    $region31: #{tpu_custom_call.1} parent=1 // pred_check_branch
      %105 = sbr.rel (0) target = $region33
    $region32: #{tpu_custom_call.1} parent=1 // pred_region
      %s107 = ssub.s32 512, 512
      %108 = vsyncadd [#allocation15], %s107
      %s109 = sshll.u32 [#allocation14], 4
      %s110 = int_to_ptr.vmem [resolvable:$true] %s109
      %115 = dma.hbm_to_vmem [thread:$0]  %s7, 512, %s110, [#allocation15], 128, 128, 8
    $region33: #{tpu_custom_call.1} parent=1 // pred_fallthru
      _
    // Predicated region
    $region34: #{tpu_custom_call.1} parent=1 // pred_check
      _
    $region35: #{tpu_custom_call.1} parent=1 // pred_check_branch
      %117 = sbr.rel (0) target = $region37
    $region36: #{tpu_custom_call.1} parent=1 // pred_region
      _
    $region37: #{tpu_custom_call.1} parent=1 // pred_fallthru
      _
    // Predicated region
    $region38: #{tpu_custom_call.1} parent=1 // pred_check
      _
    $region39: #{tpu_custom_call.1} parent=1 // pred_check_branch
      %119 = sbr.rel (0) target = $region41
    $region40: #{tpu_custom_call.1} parent=1 // pred_region
      %120 = dma.done [#allocation3], 512
    $region41: #{tpu_custom_call.1} parent=1 // pred_fallthru
      _
    // Predicated region
    $region42: #{tpu_custom_call.1} parent=1 // pred_check
      _
    $region43: #{tpu_custom_call.1} parent=1 // pred_check_branch
      %122 = sbr.rel (0) target = $region45
    $region44: #{tpu_custom_call.1} parent=1 // pred_region
      %123 = dma.done [#allocation6], 512
    $region45: #{tpu_custom_call.1} parent=1 // pred_fallthru
      _
    // Predicated region
    $region46: #{tpu_custom_call.1} parent=1 // pred_check
      _
    $region47: #{tpu_custom_call.1} parent=1 // pred_check_branch
      %125 = sbr.rel (0) target = $region49
    $region48: #{tpu_custom_call.1} parent=1 // pred_region
      %126 = dma.done [#allocation6], 512
    $region49: #{tpu_custom_call.1} parent=1 // pred_fallthru
      _
    // Predicated region
    $region50: #{tpu_custom_call.1} parent=1 // pred_check
      _
    $region51: #{tpu_custom_call.1} parent=1 // pred_check_branch
      %128 = sbr.rel (0) target = $region53
    $region52: #{tpu_custom_call.1} parent=1 // pred_region
      %129 = dma.done [#allocation9], 512
    $region53: #{tpu_custom_call.1} parent=1 // pred_fallthru
      _
    // Predicated region
    $region54: #{tpu_custom_call.1} parent=1 // pred_check
      _
    $region55: #{tpu_custom_call.1} parent=1 // pred_check_branch
      %131 = sbr.rel (0) target = $region57
    $region56: #{tpu_custom_call.1} parent=1 // pred_region
      %132 = dma.done [#allocation9], 512
    $region57: #{tpu_custom_call.1} parent=1 // pred_fallthru
      _
    // Predicated region
    $region58: #{tpu_custom_call.1} parent=1 // pred_check
      _
    $region59: #{tpu_custom_call.1} parent=1 // pred_check_branch
      %134 = sbr.rel (0) target = $region61
    $region60: #{tpu_custom_call.1} parent=1 // pred_region
      %135 = dma.done [#allocation12], 512
    $region61: #{tpu_custom_call.1} parent=1 // pred_fallthru
      _
    // Predicated region
    $region62: #{tpu_custom_call.1} parent=1 // pred_check
      _
    $region63: #{tpu_custom_call.1} parent=1 // pred_check_branch
      %137 = sbr.rel (0) target = $region65
    $region64: #{tpu_custom_call.1} parent=1 // pred_region
      %138 = dma.done [#allocation12], 512
    $region65: #{tpu_custom_call.1} parent=1 // pred_fallthru
      _
    // Predicated region
    $region66: #{tpu_custom_call.1} parent=1 // pred_check
      _
    $region67: #{tpu_custom_call.1} parent=1 // pred_check_branch
      %140 = sbr.rel (0) target = $region69
    $region68: #{tpu_custom_call.1} parent=1 // pred_region
      %141 = dma.done [#allocation15], 512
    $region69: #{tpu_custom_call.1} parent=1 // pred_fallthru
      _
    %v142 = vld [vmem:[#allocation2] sm:$0xff]
    %v143 = vld [vmem:[#allocation2 + $0x8] sm:$0xff]
    %v144 = vld [vmem:[#allocation2 + $0x10] sm:$0xff]
    %v145 = vld [vmem:[#allocation2 + $0x18] sm:$0xff]
    %v146 = vld [vmem:[#allocation10] sm:$0xff]
    %v147 = vld [vmem:[#allocation10 + $0x8] sm:$0xff]
    %v148 = vld [vmem:[#allocation10 + $0x10] sm:$0xff]
    %v149 = vld [vmem:[#allocation10 + $0x18] sm:$0xff]
    %v150 = vld [vmem:[#allocation5] sm:$0xff]
    %v151 = vld [vmem:[#allocation5 + $0x8] sm:$0xff]
    %v152 = vld [vmem:[#allocation5 + $0x10] sm:$0xff]
    %v153 = vld [vmem:[#allocation5 + $0x18] sm:$0xff]
    %v154 = vld [vmem:[#allocation11] sm:$0xff]
    %v155 = vld [vmem:[#allocation11 + $0x8] sm:$0xff]
    %v156 = vld [vmem:[#allocation11 + $0x10] sm:$0xff]
    %v157 = vld [vmem:[#allocation11 + $0x18] sm:$0xff]
    %vm158 = vcmask 261120
    %v160 = vsel %vm158, %v150, 0
    %v163 = vsel %vm158, %v151, 0
    %v166 = vsel %vm158, %v152, 0
    %v169 = vsel %vm158, %v153, 0
    %171 = vmatprep.subr.mxu0 0.0
    %172 = vmatpush1.msra.mxu0 0.0
    %173 = vmatprep.subr.mxu0 0.0
    %174 = vmatpush1.msra.mxu0 0.0
    %175 = vmatprep.subr.mxu0 0.0
    %176 = vmatpush1.msra.mxu0 0.0
    %177 = vmatprep.subr.mxu0 0.0
    %178 = vmatpush1.msra.mxu0 0.0
    %179 = vmatprep.subr.mxu0 0.0
    %180 = vmatpush1.msra.mxu0 0.0
    %181 = vmatprep.subr.mxu0 0.0
    %182 = vmatpush1.msra.mxu0 0.0
    %183 = vmatprep.subr.mxu0 0.0
    %184 = vmatpush1.msra.mxu0 0.0
    %185 = vmatprep.subr.mxu0 0.0
    %186 = vmatpush1.msra.mxu0 0.0
    %187 = vmatprep.subr.mxu0 0.0
    %188 = vmatpush1.msra.mxu0 0.0
    %189 = vmatprep.subr.mxu0 0.0
    %190 = vmatpush1.msra.mxu0 0.0
    %191 = vmatprep.subr.mxu0 0.0
    %192 = vmatpush1.msra.mxu0 0.0
    %193 = vmatprep.subr.mxu0 0.0
    %194 = vmatpush1.msra.mxu0 0.0
    %195 = vmatprep.subr.mxu0 0.0
    %196 = vmatpush1.msra.mxu0 %v157
    %197 = vmatprep.subr.mxu0 0.0
    %198 = vmatpush1.msra.mxu0 %v156
    %199 = vmatprep.subr.mxu0 0.0
    %200 = vmatpush1.msra.mxu0 %v155
    %201 = vmatprep.subr.mxu0 0.0
    %202 = vmatpush1.msra.mxu0 %v154
    %203 = vmatprep.subr.mxu0 0.0
    %204 = vmatpush2.msra.mxu0 0.0
    %205 = vmatprep.subr.mxu0 0.0
    %206 = vmatpush2.msra.mxu0 0.0
    %207 = vmatprep.subr.mxu0 0.0
    %208 = vmatpush2.msra.mxu0 0.0
    %209 = vmatprep.subr.mxu0 0.0
    %210 = vmatpush2.msra.mxu0 0.0
    %211 = vmatprep.subr.mxu0 0.0
    %212 = vmatpush2.msra.mxu0 0.0
    %213 = vmatprep.subr.mxu0 0.0
    %214 = vmatpush2.msra.mxu0 0.0
    %215 = vmatprep.subr.mxu0 0.0
    %216 = vmatpush2.msra.mxu0 0.0
    %217 = vmatprep.subr.mxu0 0.0
    %218 = vmatpush2.msra.mxu0 0.0
    %219 = vmatprep.subr.mxu0 0.0
    %220 = vmatpush2.msra.mxu0 0.0
    %221 = vmatprep.subr.mxu0 0.0
    %222 = vmatpush2.msra.mxu0 0.0
    %223 = vmatprep.subr.mxu0 0.0
    %224 = vmatpush2.msra.mxu0 0.0
    %225 = vmatprep.subr.mxu0 0.0
    %226 = vmatpush2.msra.mxu0 0.0
    %227 = vmatprep.subr.mxu0 0.0
    %228 = vmatpush2.msra.mxu0 0.0
    %229 = vmatprep.subr.mxu0 0.0
    %230 = vmatpush2.msra.mxu0 0.0
    %231 = vmatprep.subr.mxu0 0.0
    %232 = vmatpush2.msra.mxu0 0.0
    %233 = vmatprep.subr.mxu0 0.0
    %234 = vmatpush2.msra.mxu0 0.0
    %235 = vmatprep.mubr.f32.mxu0 0.0
    %236 = vmatmul.mubr.f32.gmra.mxu0 %v160
    %v237 = vpop.f32.mrf.mxu0
    %v238 = vadd.f32 0.0, %v237
    %v239 = vpop.f32.mrf.mxu0
    %240 = vmatprep.mubr.f32.mxu0 0.0
    %241 = vmatmul.mubr.f32.gmra.mxu0 %v163
    %v242 = vpop.f32.mrf.mxu0
    %v243 = vadd.f32 0.0, %v242
    %v244 = vpop.f32.mrf.mxu0
    %245 = vmatprep.mubr.f32.mxu0 0.0
    %246 = vmatmul.mubr.f32.gmra.mxu0 %v166
    %v247 = vpop.f32.mrf.mxu0
    %v248 = vadd.f32 0.0, %v247
    %v249 = vpop.f32.mrf.mxu0
    %250 = vmatprep.mubr.f32.mxu0 0.0
    %251 = vmatmul.mubr.f32.gmra.mxu0 %v169
    %v252 = vpop.f32.mrf.mxu0
    %v253 = vadd.f32 0.0, %v252
    %v254 = vpop.f32.mrf.mxu0
    %255 = vdwg.mxu0
    %v257 = vsel %vm158, %v142, 0
    %v260 = vsel %vm158, %v143, 0
    %v263 = vsel %vm158, %v144, 0
    %v266 = vsel %vm158, %v145, 0
    %268 = vmatprep.subr.mxu0 0.0
    %269 = vmatpush1.msra.mxu0 0.0
    %270 = vmatprep.subr.mxu0 0.0
    %271 = vmatpush1.msra.mxu0 0.0
    %272 = vmatprep.subr.mxu0 0.0
    %273 = vmatpush1.msra.mxu0 0.0
    %274 = vmatprep.subr.mxu0 0.0
    %275 = vmatpush1.msra.mxu0 0.0
    %276 = vmatprep.subr.mxu0 0.0
    %277 = vmatpush1.msra.mxu0 0.0
    %278 = vmatprep.subr.mxu0 0.0
    %279 = vmatpush1.msra.mxu0 0.0
    %280 = vmatprep.subr.mxu0 0.0
    %281 = vmatpush1.msra.mxu0 0.0
    %282 = vmatprep.subr.mxu0 0.0
    %283 = vmatpush1.msra.mxu0 0.0
    %284 = vmatprep.subr.mxu0 0.0
    %285 = vmatpush1.msra.mxu0 0.0
    %286 = vmatprep.subr.mxu0 0.0
    %287 = vmatpush1.msra.mxu0 0.0
    %288 = vmatprep.subr.mxu0 0.0
    %289 = vmatpush1.msra.mxu0 0.0
    %290 = vmatprep.subr.mxu0 0.0
    %291 = vmatpush1.msra.mxu0 0.0
    %292 = vmatprep.subr.mxu0 0.0
    %293 = vmatpush1.msra.mxu0 %v149
    %294 = vmatprep.subr.mxu0 0.0
    %295 = vmatpush1.msra.mxu0 %v148
    %296 = vmatprep.subr.mxu0 0.0
    %297 = vmatpush1.msra.mxu0 %v147
    %298 = vmatprep.subr.mxu0 0.0
    %299 = vmatpush1.msra.mxu0 %v146
    %300 = vmatprep.subr.mxu0 0.0
    %301 = vmatpush2.msra.mxu0 0.0
    %302 = vmatprep.subr.mxu0 0.0
    %303 = vmatpush2.msra.mxu0 0.0
    %304 = vmatprep.subr.mxu0 0.0
    %305 = vmatpush2.msra.mxu0 0.0
    %306 = vmatprep.subr.mxu0 0.0
    %307 = vmatpush2.msra.mxu0 0.0
    %308 = vmatprep.subr.mxu0 0.0
    %309 = vmatpush2.msra.mxu0 0.0
    %310 = vmatprep.subr.mxu0 0.0
    %311 = vmatpush2.msra.mxu0 0.0
    %312 = vmatprep.subr.mxu0 0.0
    %313 = vmatpush2.msra.mxu0 0.0
    %314 = vmatprep.subr.mxu0 0.0
    %315 = vmatpush2.msra.mxu0 0.0
    %316 = vmatprep.subr.mxu0 0.0
    %317 = vmatpush2.msra.mxu0 0.0
    %318 = vmatprep.subr.mxu0 0.0
    %319 = vmatpush2.msra.mxu0 0.0
    %320 = vmatprep.subr.mxu0 0.0
    %321 = vmatpush2.msra.mxu0 0.0
    %322 = vmatprep.subr.mxu0 0.0
    %323 = vmatpush2.msra.mxu0 0.0
    %324 = vmatprep.subr.mxu0 0.0
    %325 = vmatpush2.msra.mxu0 0.0
    %326 = vmatprep.subr.mxu0 0.0
    %327 = vmatpush2.msra.mxu0 0.0
    %328 = vmatprep.subr.mxu0 0.0
    %329 = vmatpush2.msra.mxu0 0.0
    %330 = vmatprep.subr.mxu0 0.0
    %331 = vmatpush2.msra.mxu0 0.0
    %332 = vmatprep.mubr.f32.mxu0 0.0
    %333 = vmatmul.mubr.f32.gmra.mxu0 %v257
    %v334 = vpop.f32.mrf.mxu0
    %v335 = vadd.f32 %v238, %v334
    %v336 = vpop.f32.mrf.mxu0
    %337 = vmatprep.mubr.f32.mxu0 0.0
    %338 = vmatmul.mubr.f32.gmra.mxu0 %v260
    %v339 = vpop.f32.mrf.mxu0
    %v340 = vadd.f32 %v243, %v339
    %v341 = vpop.f32.mrf.mxu0
    %342 = vmatprep.mubr.f32.mxu0 0.0
    %343 = vmatmul.mubr.f32.gmra.mxu0 %v263
    %v344 = vpop.f32.mrf.mxu0
    %v345 = vadd.f32 %v248, %v344
    %v346 = vpop.f32.mrf.mxu0
    %347 = vmatprep.mubr.f32.mxu0 0.0
    %348 = vmatmul.mubr.f32.gmra.mxu0 %v266
    %v349 = vpop.f32.mrf.mxu0
    %v350 = vadd.f32 %v253, %v349
    %v351 = vpop.f32.mrf.mxu0
    %352 = vdwg.mxu0
    %v353 = vld [vmem:[#allocation7] sm:$0xff]
    %v354 = vld [vmem:[#allocation7 + $0x8] sm:$0xff]
    %v355 = vld [vmem:[#allocation7 + $0x10] sm:$0xff]
    %v356 = vld [vmem:[#allocation7 + $0x18] sm:$0xff]
    %v357 = vld [vmem:[#allocation13] sm:$0xff]
    %v358 = vld [vmem:[#allocation13 + $0x8] sm:$0xff]
    %v359 = vld [vmem:[#allocation13 + $0x10] sm:$0xff]
    %v360 = vld [vmem:[#allocation13 + $0x18] sm:$0xff]
    %v362 = vsel %vm158, %v353, 0
    %v365 = vsel %vm158, %v354, 0
    %v368 = vsel %vm158, %v355, 0
    %v371 = vsel %vm158, %v356, 0
    %373 = vmatprep.subr.mxu0 0.0
    %374 = vmatpush1.msra.mxu0 0.0
    %375 = vmatprep.subr.mxu0 0.0
    %376 = vmatpush1.msra.mxu0 0.0
    %377 = vmatprep.subr.mxu0 0.0
    %378 = vmatpush1.msra.mxu0 0.0
    %379 = vmatprep.subr.mxu0 0.0
    %380 = vmatpush1.msra.mxu0 0.0
    %381 = vmatprep.subr.mxu0 0.0
    %382 = vmatpush1.msra.mxu0 0.0
    %383 = vmatprep.subr.mxu0 0.0
    %384 = vmatpush1.msra.mxu0 0.0
    %385 = vmatprep.subr.mxu0 0.0
    %386 = vmatpush1.msra.mxu0 0.0
    %387 = vmatprep.subr.mxu0 0.0
    %388 = vmatpush1.msra.mxu0 0.0
    %389 = vmatprep.subr.mxu0 0.0
    %390 = vmatpush1.msra.mxu0 0.0
    %391 = vmatprep.subr.mxu0 0.0
    %392 = vmatpush1.msra.mxu0 0.0
    %393 = vmatprep.subr.mxu0 0.0
    %394 = vmatpush1.msra.mxu0 0.0
    %395 = vmatprep.subr.mxu0 0.0
    %396 = vmatpush1.msra.mxu0 0.0
    %397 = vmatprep.subr.mxu0 0.0
    %398 = vmatpush1.msra.mxu0 %v360
    %399 = vmatprep.subr.mxu0 0.0
    %400 = vmatpush1.msra.mxu0 %v359
    %401 = vmatprep.subr.mxu0 0.0
    %402 = vmatpush1.msra.mxu0 %v358
    %403 = vmatprep.subr.mxu0 0.0
    %404 = vmatpush1.msra.mxu0 %v357
    %405 = vmatprep.subr.mxu0 0.0
    %406 = vmatpush2.msra.mxu0 0.0
    %407 = vmatprep.subr.mxu0 0.0
    %408 = vmatpush2.msra.mxu0 0.0
    %409 = vmatprep.subr.mxu0 0.0
    %410 = vmatpush2.msra.mxu0 0.0
    %411 = vmatprep.subr.mxu0 0.0
    %412 = vmatpush2.msra.mxu0 0.0
    %413 = vmatprep.subr.mxu0 0.0
    %414 = vmatpush2.msra.mxu0 0.0
    %415 = vmatprep.subr.mxu0 0.0
    %416 = vmatpush2.msra.mxu0 0.0
    %417 = vmatprep.subr.mxu0 0.0
    %418 = vmatpush2.msra.mxu0 0.0
    %419 = vmatprep.subr.mxu0 0.0
    %420 = vmatpush2.msra.mxu0 0.0
    %421 = vmatprep.subr.mxu0 0.0
    %422 = vmatpush2.msra.mxu0 0.0
    %423 = vmatprep.subr.mxu0 0.0
    %424 = vmatpush2.msra.mxu0 0.0
    %425 = vmatprep.subr.mxu0 0.0
    %426 = vmatpush2.msra.mxu0 0.0
    %427 = vmatprep.subr.mxu0 0.0
    %428 = vmatpush2.msra.mxu0 0.0
    %429 = vmatprep.subr.mxu0 0.0
    %430 = vmatpush2.msra.mxu0 0.0
    %431 = vmatprep.subr.mxu0 0.0
    %432 = vmatpush2.msra.mxu0 0.0
    %433 = vmatprep.subr.mxu0 0.0
    %434 = vmatpush2.msra.mxu0 0.0
    %435 = vmatprep.subr.mxu0 0.0
    %436 = vmatpush2.msra.mxu0 0.0
    %437 = vmatprep.mubr.f32.mxu0 0.0
    %438 = vmatmul.mubr.f32.gmra.mxu0 %v362
    %v439 = vpop.f32.mrf.mxu0
    %v440 = vadd.f32 0.0, %v439
    %v441 = vpop.f32.mrf.mxu0
    %442 = vmatprep.mubr.f32.mxu0 0.0
    %443 = vmatmul.mubr.f32.gmra.mxu0 %v365
    %v444 = vpop.f32.mrf.mxu0
    %v445 = vadd.f32 0.0, %v444
    %v446 = vpop.f32.mrf.mxu0
    %447 = vmatprep.mubr.f32.mxu0 0.0
    %448 = vmatmul.mubr.f32.gmra.mxu0 %v368
    %v449 = vpop.f32.mrf.mxu0
    %v450 = vadd.f32 0.0, %v449
    %v451 = vpop.f32.mrf.mxu0
    %452 = vmatprep.mubr.f32.mxu0 0.0
    %453 = vmatmul.mubr.f32.gmra.mxu0 %v371
    %v454 = vpop.f32.mrf.mxu0
    %v455 = vadd.f32 0.0, %v454
    %v456 = vpop.f32.mrf.mxu0
    %457 = vdwg.mxu0
    %v458 = vadd.f32 %v335, %v440
    %v459 = vadd.f32 %v340, %v445
    %v460 = vadd.f32 %v345, %v450
    %v461 = vadd.f32 %v350, %v455
    %v462 = vld [vmem:[#allocation8] sm:$0xff]
    %v463 = vld [vmem:[#allocation8 + $0x8] sm:$0xff]
    %v464 = vld [vmem:[#allocation8 + $0x10] sm:$0xff]
    %v465 = vld [vmem:[#allocation8 + $0x18] sm:$0xff]
    %v466 = vld [vmem:[#allocation14] sm:$0xff]
    %v467 = vld [vmem:[#allocation14 + $0x8] sm:$0xff]
    %v468 = vld [vmem:[#allocation14 + $0x10] sm:$0xff]
    %v469 = vld [vmem:[#allocation14 + $0x18] sm:$0xff]
    %v471 = vsel %vm158, %v462, 0
    %v474 = vsel %vm158, %v463, 0
    %v477 = vsel %vm158, %v464, 0
    %v480 = vsel %vm158, %v465, 0
    %482 = vmatprep.subr.mxu0 0.0
    %483 = vmatpush1.msra.mxu0 0.0
    %484 = vmatprep.subr.mxu0 0.0
    %485 = vmatpush1.msra.mxu0 0.0
    %486 = vmatprep.subr.mxu0 0.0
    %487 = vmatpush1.msra.mxu0 0.0
    %488 = vmatprep.subr.mxu0 0.0
    %489 = vmatpush1.msra.mxu0 0.0
    %490 = vmatprep.subr.mxu0 0.0
    %491 = vmatpush1.msra.mxu0 0.0
    %492 = vmatprep.subr.mxu0 0.0
    %493 = vmatpush1.msra.mxu0 0.0
    %494 = vmatprep.subr.mxu0 0.0
    %495 = vmatpush1.msra.mxu0 0.0
    %496 = vmatprep.subr.mxu0 0.0
    %497 = vmatpush1.msra.mxu0 0.0
    %498 = vmatprep.subr.mxu0 0.0
    %499 = vmatpush1.msra.mxu0 0.0
    %500 = vmatprep.subr.mxu0 0.0
    %501 = vmatpush1.msra.mxu0 0.0
    %502 = vmatprep.subr.mxu0 0.0
    %503 = vmatpush1.msra.mxu0 0.0
    %504 = vmatprep.subr.mxu0 0.0
    %505 = vmatpush1.msra.mxu0 0.0
    %506 = vmatprep.subr.mxu0 0.0
    %507 = vmatpush1.msra.mxu0 %v469
    %508 = vmatprep.subr.mxu0 0.0
    %509 = vmatpush1.msra.mxu0 %v468
    %510 = vmatprep.subr.mxu0 0.0
    %511 = vmatpush1.msra.mxu0 %v467
    %512 = vmatprep.subr.mxu0 0.0
    %513 = vmatpush1.msra.mxu0 %v466
    %514 = vmatprep.subr.mxu0 0.0
    %515 = vmatpush2.msra.mxu0 0.0
    %516 = vmatprep.subr.mxu0 0.0
    %517 = vmatpush2.msra.mxu0 0.0
    %518 = vmatprep.subr.mxu0 0.0
    %519 = vmatpush2.msra.mxu0 0.0
    %520 = vmatprep.subr.mxu0 0.0
    %521 = vmatpush2.msra.mxu0 0.0
    %522 = vmatprep.subr.mxu0 0.0
    %523 = vmatpush2.msra.mxu0 0.0
    %524 = vmatprep.subr.mxu0 0.0
    %525 = vmatpush2.msra.mxu0 0.0
    %526 = vmatprep.subr.mxu0 0.0
    %527 = vmatpush2.msra.mxu0 0.0
    %528 = vmatprep.subr.mxu0 0.0
    %529 = vmatpush2.msra.mxu0 0.0
    %530 = vmatprep.subr.mxu0 0.0
    %531 = vmatpush2.msra.mxu0 0.0
    %532 = vmatprep.subr.mxu0 0.0
    %533 = vmatpush2.msra.mxu0 0.0
    %534 = vmatprep.subr.mxu0 0.0
    %535 = vmatpush2.msra.mxu0 0.0
    %536 = vmatprep.subr.mxu0 0.0
    %537 = vmatpush2.msra.mxu0 0.0
    %538 = vmatprep.subr.mxu0 0.0
    %539 = vmatpush2.msra.mxu0 0.0
    %540 = vmatprep.subr.mxu0 0.0
    %541 = vmatpush2.msra.mxu0 0.0
    %542 = vmatprep.subr.mxu0 0.0
    %543 = vmatpush2.msra.mxu0 0.0
    %544 = vmatprep.subr.mxu0 0.0
    %545 = vmatpush2.msra.mxu0 0.0
    %546 = vmatprep.mubr.f32.mxu0 0.0
    %547 = vmatmul.mubr.f32.gmra.mxu0 %v471
    %v548 = vpop.f32.mrf.mxu0
    %v549 = vadd.f32 0.0, %v548
    %v550 = vpop.f32.mrf.mxu0
    %551 = vmatprep.mubr.f32.mxu0 0.0
    %552 = vmatmul.mubr.f32.gmra.mxu0 %v474
    %v553 = vpop.f32.mrf.mxu0
    %v554 = vadd.f32 0.0, %v553
    %v555 = vpop.f32.mrf.mxu0
    %556 = vmatprep.mubr.f32.mxu0 0.0
    %557 = vmatmul.mubr.f32.gmra.mxu0 %v477
    %v558 = vpop.f32.mrf.mxu0
    %v559 = vadd.f32 0.0, %v558
    %v560 = vpop.f32.mrf.mxu0
    %561 = vmatprep.mubr.f32.mxu0 0.0
    %562 = vmatmul.mubr.f32.gmra.mxu0 %v480
    %v563 = vpop.f32.mrf.mxu0
    %v564 = vadd.f32 0.0, %v563
    %v565 = vpop.f32.mrf.mxu0
    %566 = vdwg.mxu0
    %v567 = vadd.f32 %v458, %v549
    %v568 = vadd.f32 %v459, %v554
    %v569 = vadd.f32 %v460, %v559
    %v570 = vadd.f32 %v461, %v564
    %v571 = vld [vmem:[%s8] sm:$0x1]
    %v573 = vlaneseq
    %v574 = vshrl.u32 %v573, 7
    %v575 = vsub.s32 0, %v574
    %v576 = vrot.slane %v571, %v575
    %v578 = vadd.f32 %v567, %v576
    %v579 = vadd.f32 %v568, %v576
    %v580 = vadd.f32 %v569, %v576
    %v581 = vadd.f32 %v570, %v576
    %v582 = vmax.f32 %v578, 0.0
    %v583 = vmax.f32 %v579, 0.0
    %v584 = vmax.f32 %v580, 0.0
    %v585 = vmax.f32 %v581, 0.0
    %586 = vst [vmem:[#allocation16] sm:$0xff] %v582
    %587 = vst [vmem:[#allocation16 + $0x8] sm:$0xff] %v583
    %588 = vst [vmem:[#allocation16 + $0x10] sm:$0xff] %v584
    %589 = vst [vmem:[#allocation16 + $0x18] sm:$0xff] %v585
    // Predicated region
    $region70: #{tpu_custom_call.1} parent=1 // pred_check
      _
    $region71: #{tpu_custom_call.1} parent=1 // pred_check_branch
      %591 = sbr.rel (0) target = $region73
    $region72: #{tpu_custom_call.1} parent=1 // pred_region
      %s593 = ssub.s32 512, 512
      %594 = vsyncadd [#allocation4], %s593
      %s595 = sshll.u32 [#allocation16], 4
      %s596 = int_to_ptr.vmem [resolvable:$true] %s595
      %601 = dma.vmem_to_hbm [thread:$0]  %s596, 512, %s9, [#allocation4], 128, 128, 8
    $region73: #{tpu_custom_call.1} parent=1 // pred_fallthru
      _
    // Predicated region
    $region74: #{tpu_custom_call.1} parent=1 // pred_check
      _
    $region75: #{tpu_custom_call.1} parent=1 // pred_check_branch
      %603 = sbr.rel (0) target = $region77
    $region76: #{tpu_custom_call.1} parent=1 // pred_region
      %604 = dma.done [#allocation4], 512
    $region77: #{tpu_custom_call.1} parent=1 // pred_fallthru
      _
    %605 = vsyncpa [#allocation3], 1
    %606 = vsyncpa [#allocation6], 1
    %607 = vsyncpa [#allocation9], 1
    %608 = vsyncpa [#allocation12], 1
    %609 = vsyncpa [#allocation15], 1
    %610 = vsyncpa [#allocation4], 1

</llo_original>
